<compile_context>
chip_gen: v6e
topology: v6e:2x2x1
jax: 0.10.0
libtpu: 0.0.40
codegen_flags: <defaults>
</compile_context>

<pallas_src>
import functools

import jax
import jax.numpy as jnp
from jax.experimental import pallas as pl
from jax.experimental.pallas import tpu as pltpu


def _round_up(a, b):
    return (a + b - 1) // b * b


def _merge_matmul_kernel(p_ref, w_ref, o_ref):
    # One (tm, K) x (K, outp) MXU matmul per grid step; f32 accumulation.
    o_ref[...] = jnp.dot(
        p_ref[...], w_ref[...], preferred_element_type=jnp.float32
    ).astype(o_ref.dtype)


def _pick_tiling(M, K, outp, itemsize, target=512, vmem_budget=40 * (1 << 20)):
    """Pick the row tile tm and the (possibly padded) row count Mp.

    Goals: tm divides M exactly (no pad/slice passes), tm multiple of 8 unless
    tm == M, >= 4 grid steps when possible (v7x megacore overlap), and the
    double-buffered blocks fit a v7x-safe VMEM budget.
    """
    def blocks_bytes(tm):
        return (2 * tm * K * itemsize        # lhs blocks (double buffered)
                + 2 * K * outp * itemsize    # resident weight (2 buffers)
                + 2 * tm * outp * 4)         # f32 output blocks

    while target > 8 and blocks_bytes(target) > vmem_budget:
        target //= 2

    cap = min(M, target)
    cands = [d for d in range(8, cap + 1, 8) if M % d == 0]
    if cands:
        pref = [d for d in cands if M // d >= 4]
        tm = max(pref) if pref else max(cands)
        return tm, M
    if M <= target:
        # Tiny / oddly sized M: single full-extent block (allowed by Mosaic).
        return M, M
    # Rare fallback (no multiple-of-8 divisor <= target): pad the rows.
    tm = max(8, target)
    return tm, _round_up(M, tm)


@functools.partial(jax.jit, static_argnames=("tm", "compute_dtype"))
def image_merging(x_nchw, w_oihw, *, tm=512, compute_dtype=None):
    """ImageMerging.forward.

    x_nchw: (B, C, H, W) float32, H % 4 == 0, W % 4 == 0
    w_oihw: (out, C, 4, 4) float32 (PyTorch Conv2d weight, bias=False)
    returns: (B, H//4, W//4, out)   -- rearrange('B C H W -> B H W C')
    """
    B, C, H, W = x_nchw.shape
    out_ch = w_oihw.shape[0]
    Ho, Wo = H // 4, W // 4
    M = B * Ho * Wo
    K = C * 16

    cdtype = jnp.dtype(compute_dtype) if compute_dtype is not None else x_nchw.dtype
    itemsize = cdtype.itemsize

    # Lane-dense output: pad out-channels to a multiple of 128 so stores are
    # full-lane `vst` (no masked partial stores); slice the padding afterwards.
    outp = _round_up(out_ch, 128) if out_ch % 128 else out_ch

    # --- layout glue: single fused XLA reshape+transpose(+cast) pass.
    # Non-overlapping 4x4 windows => no data duplication (pure relayout).
    patches = x_nchw.reshape(B, C, Ho, 4, Wo, 4)
    patches = jnp.transpose(patches, (0, 2, 4, 1, 3, 5)).reshape(M, K)
    patches = patches.astype(cdtype)
    # (out, C, 4, 4) -> (K, outp), K ordered (c, ky, kx).
    wf = jnp.transpose(w_oihw, (1, 2, 3, 0)).reshape(K, out_ch).astype(cdtype)
    if outp != out_ch:
        wf = jnp.pad(wf, ((0, 0), (0, outp - out_ch)))

    tm_eff, Mp = _pick_tiling(M, K, outp, itemsize, target=tm)
    if Mp != M:  # rare fallback; typical ImageMerging shapes hit an exact divisor
        patches = jnp.pad(patches, ((0, Mp - M), (0, 0)))

    grid_steps = Mp // tm_eff

    # Scoped-VMEM limit: at least the 32 MiB default, never above a v7x-safe
    # 48 MiB (v5e/v6e have 128 MiB physical, v7x only 64 MiB per TensorCore).
    vmem_need = (2 * tm_eff * K * itemsize + 2 * K * outp * itemsize
                 + 2 * tm_eff * outp * 4 + (2 << 20))
    vmem_limit = int(min(max(vmem_need, 32 * (1 << 20)), 48 * (1 << 20)))

    cost = pl.CostEstimate(
        flops=2 * M * K * outp,
        transcendentals=0,
        # lhs read once, weight read once, f32 output written once.
        bytes_accessed=itemsize * (M * K + K * outp) + 4 * M * outp,
    )

    y = pl.pallas_call(
        _merge_matmul_kernel,
        out_shape=jax.ShapeDtypeStruct((Mp, outp), jnp.float32),
        grid_spec=pltpu.PrefetchScalarGridSpec(
            num_scalar_prefetch=0,
            grid=(grid_steps,),
            in_specs=[
                pl.BlockSpec((tm_eff, K), lambda i: (i, 0)),
                # Constant index_map: the weight slab is DMA'd once and stays
                # resident in VMEM across all row tiles.
                pl.BlockSpec((K, outp), lambda i: (0, 0)),
            ],
            out_specs=pl.BlockSpec((tm_eff, outp), lambda i: (i, 0)),
        ),
        compiler_params=pltpu.CompilerParams(
            dimension_semantics=("parallel",),
            vmem_limit_bytes=vmem_limit,
            allow_input_fusion=[True, True],
        ),
        cost_estimate=cost,
    )(patches, wf)

    if Mp != M:
        y = y[:M]
    if outp != out_ch:
        y = y[:, :out_ch]
    return y.reshape(B, Ho, Wo, out_ch)


if __name__ == "__main__":
    key = jax.random.PRNGKey(0)
    kx, kw = jax.random.split(key)

    # Small shapes consistent with the module (out = 2*dim, H,W % 4 == 0).
    B, dim, H, W = 2, 64, 64, 64
    out_ch = 2 * dim

    x = jax.random.normal(kx, (B, dim, H, W), jnp.float32)
    w = jax.random.normal(kw, (out_ch, dim, 4, 4), jnp.float32) / jnp.sqrt(
        dim * 16.0
    )

    y = image_merging(x, w)
    y = jax.block_until_ready(y)
    assert y.shape == (B, H // 4, W // 4, out_ch), y.shape

    # Reference: XLA conv (highest precision) + the module's rearrange.
    ref = jax.lax.conv_general_dilated(
        x, w, window_strides=(4, 4), padding="VALID",
        dimension_numbers=("NCHW", "OIHW", "NCHW"),
        precision=jax.lax.Precision.HIGHEST)
    ref = jnp.transpose(ref, (0, 2, 3, 1))

    assert bool(jnp.isfinite(y).all())
    max_err = float(jnp.max(jnp.abs(y - ref)))
    assert bool(jnp.allclose(y, ref, rtol=2e-3, atol=2e-3)), max_err
    print("KERNEL_OK")
</pallas_src>

<mosaic_0001>
module attributes {stable_mosaic.version = 11 : i64} {
  func.func @_merge_matmul_kernel(%arg0: i32, %arg1: memref<128x1024xf32, #tpu.memory_space<vmem>>, %arg2: memref<1024x128xf32, #tpu.memory_space<vmem>>, %arg3: memref<128x128xf32, #tpu.memory_space<vmem>>) attributes {dimension_semantics = [#tpu.dimension_semantics<parallel>], iteration_bounds = array<i64: 4>, scalar_prefetch = 0 : i64, scratch_operands = 0 : i64, tpu.core_type = #tpu.core_type<tc>, window_params = [{transform_indices = @transform_0, window_bounds = array<i64: 128, 1024>}, {pipeline_mode = #tpu.pipeline_mode<synchronous>, transform_indices = @transform_1, window_bounds = array<i64: 1024, 128>}, {transform_indices = @transform_2, window_bounds = array<i64: 128, 128>}]} {
    %c0 = arith.constant 0 : index
    %c0_0 = arith.constant 0 : index
    %0 = vector.load %arg1[%c0, %c0_0] : memref<128x1024xf32, #tpu.memory_space<vmem>>, vector<128x1024xf32>
    %c0_1 = arith.constant 0 : index
    %c0_2 = arith.constant 0 : index
    %1 = vector.load %arg2[%c0_1, %c0_2] : memref<1024x128xf32, #tpu.memory_space<vmem>>, vector<1024x128xf32>
    %cst = arith.constant dense<0.000000e+00> : vector<128x128xf32>
    %2 = tpu.matmul %0, %1, %cst {dimension_numbers = #tpu.dot_dimension_numbers<[1], [0], [0], [1], [0, 0, 1, 1], [], []>} : vector<128x1024xf32>, vector<1024x128xf32>, vector<128x128xf32> -> vector<128x128xf32>
    %c0_3 = arith.constant 0 : index
    %c0_4 = arith.constant 0 : index
    %3 = vector.load %arg3[%c0_3, %c0_4] : memref<128x128xf32, #tpu.memory_space<vmem>>, vector<128x128xf32>
    tpu.vector_store %arg3[%c0_3, %c0_4], %2 {strides = array<i32>} : memref<128x128xf32, #tpu.memory_space<vmem>>, vector<128x128xf32>,
    return
  }
  func.func @transform_0(%arg0: i32) -> (i32, i32) {
    %c0_i32 = arith.constant 0 : i32
    %c0_i32_0 = arith.constant 0 : i32
    return %arg0, %c0_i32 : i32, i32
  }
  func.func @transform_1(%arg0: i32) -> (i32, i32) {
    %c0_i32 = arith.constant 0 : i32
    %c0_i32_0 = arith.constant 0 : i32
    %c0_i32_1 = arith.constant 0 : i32
    return %c0_i32, %c0_i32_0 : i32, i32
  }
  func.func @transform_2(%arg0: i32) -> (i32, i32) {
    %c0_i32 = arith.constant 0 : i32
    %c0_i32_0 = arith.constant 0 : i32
    return %arg0, %c0_i32 : i32, i32
  }
}

</mosaic_0001>

<llo_original>
// kernel: image_merging.1
$region0: #{image_merging.1}
  #allocation0 [shape = 'u32[]', space=smem, size = 0x4, offset = 0x4, fixed_abs, tag = 'smem constant byte address 0x4 - core index']
  #allocation1 [shape = 'u32[144,128]{1,0:T(1,128)}', space=vmem, size = 0x12000, scoped, tag = 'internal scratch']
  %s0 = inlined_call_operand.vmem [shape: f32[512,1024], index: 0, kind: input, shape index: {}]
  %s1 = inlined_call_operand.vmem [shape: f32[1024,128], index: 1, kind: input, shape index: {}]
  %s2 = inlined_call_operand.hbm [shape: f32[512,128], index: 2, kind: output, shape index: {}]
  %s3 = sld [smem:[#allocation0]]
  $region41: #{image_merging.1} parent=0
    _
  %s5 = ssub.s32 1, %s3
  %s6 = scalar_select 0, %s5, %s3
  $region1: #{image_merging.1} parent=0
    #allocation2 [shape = 'u8[131072]{0}', space=vmem, size = 0x20000, scoped, tag = 'output window, operand 0']
    #allocation3 [shape = 's32[2]{0}', space=sflag, size = 0x8, scoped, tag = 'scoped memory for image_merging.1']
    %7 = vsyncpa [#allocation3], 0
    %s8 = scalar_lea.sflag [#allocation3], 1
    %9 = vsyncpa %s8, 0
    loop: start=0, step=1, limit=6
    $region2: #{image_merging.1} parent=1 // loop_pre_header
      _
    $region3: #{image_merging.1} parent=1 // loop_header
      %s11 = sphi 0, %s15
      %p12 = scmp.ge.s32.totalorder %s11, 6
      %s21 = sphi 0, %s23
      %s24 = sphi 0, %s21
      %s25 = sphi 0, %s24
      %s41 = sphi 0, %s25
      %s45 = sphi 0, %s45
      %s47 = sphi 0, %s45
      %s48 = sphi 0, %s47
      %s62 = sphi 0, %s48
      %s68 = sphi 0, %s70
      %s71 = sphi 0, %s68
      %s72 = sphi 0, %s71
      %s88 = sphi 0, %s72
    $region4: #{image_merging.1} parent=1 // loop_header_branch
      %14 = sbr.rel (%p12) target = $region8
    $region5: #{image_merging.1} parent=1 // loop_body
      %s16 = ssub.s32 %s11, 1
      %s17 = ssub.s32 %s11, 2
      %s18 = sadd.s32 %s11, 1
      %s19 = ssub.s32 %s11, %s18
      %p20 = scmp.eq.s32.totalorder %s19, 0
      %s22 = sadd.s32 %s21, 1
      %s23 = scalar_select %p20, %s21, %s22
      %p26 = pneg %p20
      %p27 = scmp.eq.s32.totalorder %s11, 3
      %p28 = por %p26, %p27
      %p29 = scmp.ne.s32.totalorder %s21, %s24
      %p30 = scmp.eq.s32.totalorder %s11, 0
      %p31 = por %p29, %p30
      %p32 = scmp.ne.s32.totalorder %s21, %s24
      %p33 = scmp.eq.s32.totalorder %s16, 3
      %p34 = por %p32, %p33
      %p35 = scmp.ne.s32.totalorder %s24, %s25
      %p36 = scmp.eq.s32.totalorder %s16, 0
      %p37 = por %p35, %p36
      %p38 = scmp.ne.s32.totalorder %s24, %s25
      %p39 = scmp.eq.s32.totalorder %s17, 3
      %p40 = por %p38, %p39
      %p42 = scmp.ne.s32.totalorder %s25, %s41
      %p43 = scmp.eq.s32.totalorder %s17, 0
      %p44 = por %p42, %p43
      %s46 = sadd.s32 %s45, 1
      %p49 = scmp.eq.s32.totalorder %s11, 3
      %p50 = scmp.ne.s32.totalorder %s45, %s47
      %p51 = scmp.eq.s32.totalorder %s11, 0
      %p52 = por %p50, %p51
      %p53 = scmp.ne.s32.totalorder %s45, %s47
      %p54 = scmp.eq.s32.totalorder %s16, 3
      %p55 = por %p53, %p54
      %p56 = scmp.ne.s32.totalorder %s47, %s48
      %p57 = scmp.eq.s32.totalorder %s16, 0
      %p58 = por %p56, %p57
      %p59 = scmp.ne.s32.totalorder %s47, %s48
      %p60 = scmp.eq.s32.totalorder %s17, 3
      %p61 = por %p59, %p60
      %p63 = scmp.ne.s32.totalorder %s48, %s62
      %p64 = scmp.eq.s32.totalorder %s17, 0
      %p65 = por %p63, %p64
      %s66 = ssub.s32 %s11, %s18
      %p67 = scmp.eq.s32.totalorder %s66, 0
      %s69 = sadd.s32 %s68, 1
      %s70 = scalar_select %p67, %s68, %s69
      %p73 = pneg %p67
      %p74 = scmp.eq.s32.totalorder %s11, 3
      %p75 = por %p73, %p74
      %p76 = scmp.ne.s32.totalorder %s68, %s71
      %p77 = scmp.eq.s32.totalorder %s11, 0
      %p78 = por %p76, %p77
      %p79 = scmp.ne.s32.totalorder %s68, %s71
      %p80 = scmp.eq.s32.totalorder %s16, 3
      %p81 = por %p79, %p80
      %p82 = scmp.ne.s32.totalorder %s71, %s72
      %p83 = scmp.eq.s32.totalorder %s16, 0
      %p84 = por %p82, %p83
      %p85 = scmp.ne.s32.totalorder %s71, %s72
      %p86 = scmp.eq.s32.totalorder %s17, 3
      %p87 = por %p85, %p86
      %p89 = scmp.ne.s32.totalorder %s72, %s88
      %p90 = scmp.eq.s32.totalorder %s17, 0
      %p91 = por %p89, %p90
      %p92 = scmp.le.s32.totalorder 1, %s11
      %p93 = scmp.lt.s32.totalorder %s11, 5
      %p94 = pnand %p92, %p93
      %p95 = pneg %p94
      // Predicated region
      $region9: #{image_merging.1} parent=5 // pred_check
        _
      $region10: #{image_merging.1} parent=5 // pred_check_branch
        %97 = sbr.rel (%p94) target = $region12
      $region11: #{image_merging.1} parent=5 // pred_region
        %s98 = ssub.s32 %s11, 1
        // Predicated region
        $region13: #{image_merging.1} parent=11 // pred_check
          %p99 = pneg %p58
        $region14: #{image_merging.1} parent=11 // pred_check_branch
          %101 = sbr.rel (%p99) target = $region16
        $region15: #{image_merging.1} parent=11 // pred_region
          _
        $region16: #{image_merging.1} parent=11 // pred_fallthru
          _
      $region12: #{image_merging.1} parent=5 // pred_fallthru
        _
      %p102 = scmp.lt.s32.totalorder %s11, 4
      // Predicated region
      $region17: #{image_merging.1} parent=5 // pred_check
        %p103 = pneg %p102
      $region18: #{image_merging.1} parent=5 // pred_check_branch
        %105 = sbr.rel (%p103) target = $region20
      $region19: #{image_merging.1} parent=5 // pred_region
        // Predicated region
        $region21: #{image_merging.1} parent=19 // pred_check
          %p106 = pneg %p31
        $region22: #{image_merging.1} parent=19 // pred_check_branch
          %108 = sbr.rel (%p106) target = $region24
        $region23: #{image_merging.1} parent=19 // pred_region
          %s109 = smul.u32 16, %s11
          %p110 = scmp.lt.s32.totalorder %s109, 63
          %s111 = scalar_select %p110, %s109, 63
          %s112 = smul.addr %s111, 8
          %s113 = smul.addr %s112, 8
          %s114 = scalar_lea.vmem %s0, %s113
          %s115 = smul.u32 16, %s11
        $region24: #{image_merging.1} parent=19 // pred_fallthru
          _
      $region20: #{image_merging.1} parent=5 // pred_fallthru
        _
      %p116 = scmp.le.s32.totalorder 1, %s11
      %p117 = scmp.lt.s32.totalorder %s11, 5
      %p118 = pnand %p116, %p117
      %p119 = pneg %p118
      // Predicated region
      $region25: #{image_merging.1} parent=5 // pred_check
        _
      $region26: #{image_merging.1} parent=5 // pred_check_branch
        %121 = sbr.rel (%p118) target = $region28
      $region27: #{image_merging.1} parent=5 // pred_region
        %s122 = ssub.s32 %s11, 1
        %s123 = smul.u32 16, %s16
        %p124 = scmp.lt.s32.totalorder %s123, 63
        %s125 = scalar_select %p124, %s123, 63
        %s126 = smul.addr %s125, 8
        %s127 = smul.addr %s126, 8
        %s128 = scalar_lea.vmem %s0, %s127
        %p129 = pneg %p37
        %p130 = pneg %p34
        %p131 = pneg %p58
        %p132 = pneg %p55
        %p133 = pneg %p84
        %p134 = pneg %p81
        %s135 = sand.u32 %s71, 1
        %s136 = scalar_lea.sflag [#allocation3], %s135
        %s137 = sand.u32 %s71, 1
        %s138 = smul.addr %s137, 128
        %s139 = scalar_lea.vmem [#allocation2], %s138
        %s140 = smul.u32 16, %s16
        %p141 = scmp.lt.s32.totalorder %s140, 63
        %s142 = scalar_select %p141, %s140, 63
        %s143 = smul.addr %s142, 8
        %s144 = smul.addr %s143, 8
        %s145 = scalar_lea.vmem %s0, %s144
        %s146 = smul.u32 16, %s16
        %s147 = smul.u32 16, %s16
        %v148 = vld [vmem:[%s145] sm:$0xff]
        %v149 = vld [vmem:[%s145 + $0x8] sm:$0xff]
        %v150 = vld [vmem:[%s145 + $0x10] sm:$0xff]
        %v151 = vld [vmem:[%s145 + $0x18] sm:$0xff]
        %v152 = vld [vmem:[%s145 + $0x20] sm:$0xff]
        %v153 = vld [vmem:[%s145 + $0x28] sm:$0xff]
        %v154 = vld [vmem:[%s145 + $0x30] sm:$0xff]
        %v155 = vld [vmem:[%s145 + $0x38] sm:$0xff]
        %v156 = vld [vmem:[%s145 + $0x40] sm:$0xff]
        %v157 = vld [vmem:[%s145 + $0x48] sm:$0xff]
        %v158 = vld [vmem:[%s145 + $0x50] sm:$0xff]
        %v159 = vld [vmem:[%s145 + $0x58] sm:$0xff]
        %v160 = vld [vmem:[%s145 + $0x60] sm:$0xff]
        %v161 = vld [vmem:[%s145 + $0x68] sm:$0xff]
        %v162 = vld [vmem:[%s145 + $0x70] sm:$0xff]
        %v163 = vld [vmem:[%s145 + $0x78] sm:$0xff]
        %v164 = vld [vmem:[%s145 + $0x80] sm:$0xff]
        %v165 = vld [vmem:[%s145 + $0x88] sm:$0xff]
        %v166 = vld [vmem:[%s145 + $0x90] sm:$0xff]
        %v167 = vld [vmem:[%s145 + $0x98] sm:$0xff]
        %v168 = vld [vmem:[%s145 + $0xa0] sm:$0xff]
        %v169 = vld [vmem:[%s145 + $0xa8] sm:$0xff]
        %v170 = vld [vmem:[%s145 + $0xb0] sm:$0xff]
        %v171 = vld [vmem:[%s145 + $0xb8] sm:$0xff]
        %v172 = vld [vmem:[%s145 + $0xc0] sm:$0xff]
        %v173 = vld [vmem:[%s145 + $0xc8] sm:$0xff]
        %v174 = vld [vmem:[%s145 + $0xd0] sm:$0xff]
        %v175 = vld [vmem:[%s145 + $0xd8] sm:$0xff]
        %v176 = vld [vmem:[%s145 + $0xe0] sm:$0xff]
        %v177 = vld [vmem:[%s145 + $0xe8] sm:$0xff]
        %v178 = vld [vmem:[%s145 + $0xf0] sm:$0xff]
        %v179 = vld [vmem:[%s145 + $0xf8] sm:$0xff]
        %v180 = vld [vmem:[%s145 + $0x100] sm:$0xff]
        %v181 = vld [vmem:[%s145 + $0x108] sm:$0xff]
        %v182 = vld [vmem:[%s145 + $0x110] sm:$0xff]
        %v183 = vld [vmem:[%s145 + $0x118] sm:$0xff]
        %v184 = vld [vmem:[%s145 + $0x120] sm:$0xff]
        %v185 = vld [vmem:[%s145 + $0x128] sm:$0xff]
        %v186 = vld [vmem:[%s145 + $0x130] sm:$0xff]
        %v187 = vld [vmem:[%s145 + $0x138] sm:$0xff]
        %v188 = vld [vmem:[%s145 + $0x140] sm:$0xff]
        %v189 = vld [vmem:[%s145 + $0x148] sm:$0xff]
        %v190 = vld [vmem:[%s145 + $0x150] sm:$0xff]
        %v191 = vld [vmem:[%s145 + $0x158] sm:$0xff]
        %v192 = vld [vmem:[%s145 + $0x160] sm:$0xff]
        %v193 = vld [vmem:[%s145 + $0x168] sm:$0xff]
        %v194 = vld [vmem:[%s145 + $0x170] sm:$0xff]
        %v195 = vld [vmem:[%s145 + $0x178] sm:$0xff]
        %v196 = vld [vmem:[%s145 + $0x180] sm:$0xff]
        %v197 = vld [vmem:[%s145 + $0x188] sm:$0xff]
        %v198 = vld [vmem:[%s145 + $0x190] sm:$0xff]
        %v199 = vld [vmem:[%s145 + $0x198] sm:$0xff]
        %v200 = vld [vmem:[%s145 + $0x1a0] sm:$0xff]
        %v201 = vld [vmem:[%s145 + $0x1a8] sm:$0xff]
        %v202 = vld [vmem:[%s145 + $0x1b0] sm:$0xff]
        %v203 = vld [vmem:[%s145 + $0x1b8] sm:$0xff]
        %v204 = vld [vmem:[%s145 + $0x1c0] sm:$0xff]
        %v205 = vld [vmem:[%s145 + $0x1c8] sm:$0xff]
        %v206 = vld [vmem:[%s145 + $0x1d0] sm:$0xff]
        %v207 = vld [vmem:[%s145 + $0x1d8] sm:$0xff]
        %v208 = vld [vmem:[%s145 + $0x1e0] sm:$0xff]
        %v209 = vld [vmem:[%s145 + $0x1e8] sm:$0xff]
        %v210 = vld [vmem:[%s145 + $0x1f0] sm:$0xff]
        %v211 = vld [vmem:[%s145 + $0x1f8] sm:$0xff]
        %v212 = vld [vmem:[%s145 + $0x200] sm:$0xff]
        %v213 = vld [vmem:[%s145 + $0x208] sm:$0xff]
        %v214 = vld [vmem:[%s145 + $0x210] sm:$0xff]
        %v215 = vld [vmem:[%s145 + $0x218] sm:$0xff]
        %v216 = vld [vmem:[%s145 + $0x220] sm:$0xff]
        %v217 = vld [vmem:[%s145 + $0x228] sm:$0xff]
        %v218 = vld [vmem:[%s145 + $0x230] sm:$0xff]
        %v219 = vld [vmem:[%s145 + $0x238] sm:$0xff]
        %v220 = vld [vmem:[%s145 + $0x240] sm:$0xff]
        %v221 = vld [vmem:[%s145 + $0x248] sm:$0xff]
        %v222 = vld [vmem:[%s145 + $0x250] sm:$0xff]
        %v223 = vld [vmem:[%s145 + $0x258] sm:$0xff]
        %v224 = vld [vmem:[%s145 + $0x260] sm:$0xff]
        %v225 = vld [vmem:[%s145 + $0x268] sm:$0xff]
        %v226 = vld [vmem:[%s145 + $0x270] sm:$0xff]
        %v227 = vld [vmem:[%s145 + $0x278] sm:$0xff]
        %v228 = vld [vmem:[%s145 + $0x280] sm:$0xff]
        %v229 = vld [vmem:[%s145 + $0x288] sm:$0xff]
        %v230 = vld [vmem:[%s145 + $0x290] sm:$0xff]
        %v231 = vld [vmem:[%s145 + $0x298] sm:$0xff]
        %v232 = vld [vmem:[%s145 + $0x2a0] sm:$0xff]
        %v233 = vld [vmem:[%s145 + $0x2a8] sm:$0xff]
        %v234 = vld [vmem:[%s145 + $0x2b0] sm:$0xff]
        %v235 = vld [vmem:[%s145 + $0x2b8] sm:$0xff]
        %v236 = vld [vmem:[%s145 + $0x2c0] sm:$0xff]
        %v237 = vld [vmem:[%s145 + $0x2c8] sm:$0xff]
        %v238 = vld [vmem:[%s145 + $0x2d0] sm:$0xff]
        %v239 = vld [vmem:[%s145 + $0x2d8] sm:$0xff]
        %v240 = vld [vmem:[%s145 + $0x2e0] sm:$0xff]
        %v241 = vld [vmem:[%s145 + $0x2e8] sm:$0xff]
        %v242 = vld [vmem:[%s145 + $0x2f0] sm:$0xff]
        %v243 = vld [vmem:[%s145 + $0x2f8] sm:$0xff]
        %v244 = vld [vmem:[%s145 + $0x300] sm:$0xff]
        %v245 = vld [vmem:[%s145 + $0x308] sm:$0xff]
        %v246 = vld [vmem:[%s145 + $0x310] sm:$0xff]
        %v247 = vld [vmem:[%s145 + $0x318] sm:$0xff]
        %v248 = vld [vmem:[%s145 + $0x320] sm:$0xff]
        %v249 = vld [vmem:[%s145 + $0x328] sm:$0xff]
        %v250 = vld [vmem:[%s145 + $0x330] sm:$0xff]
        %v251 = vld [vmem:[%s145 + $0x338] sm:$0xff]
        %v252 = vld [vmem:[%s145 + $0x340] sm:$0xff]
        %v253 = vld [vmem:[%s145 + $0x348] sm:$0xff]
        %v254 = vld [vmem:[%s145 + $0x350] sm:$0xff]
        %v255 = vld [vmem:[%s145 + $0x358] sm:$0xff]
        %v256 = vld [vmem:[%s145 + $0x360] sm:$0xff]
        %v257 = vld [vmem:[%s145 + $0x368] sm:$0xff]
        %v258 = vld [vmem:[%s145 + $0x370] sm:$0xff]
        %v259 = vld [vmem:[%s145 + $0x378] sm:$0xff]
        %v260 = vld [vmem:[%s145 + $0x380] sm:$0xff]
        %v261 = vld [vmem:[%s145 + $0x388] sm:$0xff]
        %v262 = vld [vmem:[%s145 + $0x390] sm:$0xff]
        %v263 = vld [vmem:[%s145 + $0x398] sm:$0xff]
        %v264 = vld [vmem:[%s145 + $0x3a0] sm:$0xff]
        %v265 = vld [vmem:[%s145 + $0x3a8] sm:$0xff]
        %v266 = vld [vmem:[%s145 + $0x3b0] sm:$0xff]
        %v267 = vld [vmem:[%s145 + $0x3b8] sm:$0xff]
        %v268 = vld [vmem:[%s145 + $0x3c0] sm:$0xff]
        %v269 = vld [vmem:[%s145 + $0x3c8] sm:$0xff]
        %v270 = vld [vmem:[%s145 + $0x3d0] sm:$0xff]
        %v271 = vld [vmem:[%s145 + $0x3d8] sm:$0xff]
        %v272 = vld [vmem:[%s145 + $0x3e0] sm:$0xff]
        %v273 = vld [vmem:[%s145 + $0x3e8] sm:$0xff]
        %v274 = vld [vmem:[%s145 + $0x3f0] sm:$0xff]
        %v275 = vld [vmem:[%s145 + $0x3f8] sm:$0xff]
        %v276 = vld [vmem:[%s1] sm:$0xff]
        %v277 = vld [vmem:[%s1 + $0x8] sm:$0xff]
        %v278 = vld [vmem:[%s1 + $0x10] sm:$0xff]
        %v279 = vld [vmem:[%s1 + $0x18] sm:$0xff]
        %v280 = vld [vmem:[%s1 + $0x20] sm:$0xff]
        %v281 = vld [vmem:[%s1 + $0x28] sm:$0xff]
        %v282 = vld [vmem:[%s1 + $0x30] sm:$0xff]
        %v283 = vld [vmem:[%s1 + $0x38] sm:$0xff]
        %v284 = vld [vmem:[%s1 + $0x40] sm:$0xff]
        %v285 = vld [vmem:[%s1 + $0x48] sm:$0xff]
        %v286 = vld [vmem:[%s1 + $0x50] sm:$0xff]
        %v287 = vld [vmem:[%s1 + $0x58] sm:$0xff]
        %v288 = vld [vmem:[%s1 + $0x60] sm:$0xff]
        %v289 = vld [vmem:[%s1 + $0x68] sm:$0xff]
        %v290 = vld [vmem:[%s1 + $0x70] sm:$0xff]
        %v291 = vld [vmem:[%s1 + $0x78] sm:$0xff]
        %v292 = vld [vmem:[%s1 + $0x80] sm:$0xff]
        %v293 = vld [vmem:[%s1 + $0x88] sm:$0xff]
        %v294 = vld [vmem:[%s1 + $0x90] sm:$0xff]
        %v295 = vld [vmem:[%s1 + $0x98] sm:$0xff]
        %v296 = vld [vmem:[%s1 + $0xa0] sm:$0xff]
        %v297 = vld [vmem:[%s1 + $0xa8] sm:$0xff]
        %v298 = vld [vmem:[%s1 + $0xb0] sm:$0xff]
        %v299 = vld [vmem:[%s1 + $0xb8] sm:$0xff]
        %v300 = vld [vmem:[%s1 + $0xc0] sm:$0xff]
        %v301 = vld [vmem:[%s1 + $0xc8] sm:$0xff]
        %v302 = vld [vmem:[%s1 + $0xd0] sm:$0xff]
        %v303 = vld [vmem:[%s1 + $0xd8] sm:$0xff]
        %v304 = vld [vmem:[%s1 + $0xe0] sm:$0xff]
        %v305 = vld [vmem:[%s1 + $0xe8] sm:$0xff]
        %v306 = vld [vmem:[%s1 + $0xf0] sm:$0xff]
        %v307 = vld [vmem:[%s1 + $0xf8] sm:$0xff]
        %v308 = vld [vmem:[%s1 + $0x100] sm:$0xff]
        %v309 = vld [vmem:[%s1 + $0x108] sm:$0xff]
        %v310 = vld [vmem:[%s1 + $0x110] sm:$0xff]
        %v311 = vld [vmem:[%s1 + $0x118] sm:$0xff]
        %v312 = vld [vmem:[%s1 + $0x120] sm:$0xff]
        %v313 = vld [vmem:[%s1 + $0x128] sm:$0xff]
        %v314 = vld [vmem:[%s1 + $0x130] sm:$0xff]
        %v315 = vld [vmem:[%s1 + $0x138] sm:$0xff]
        %v316 = vld [vmem:[%s1 + $0x140] sm:$0xff]
        %v317 = vld [vmem:[%s1 + $0x148] sm:$0xff]
        %v318 = vld [vmem:[%s1 + $0x150] sm:$0xff]
        %v319 = vld [vmem:[%s1 + $0x158] sm:$0xff]
        %v320 = vld [vmem:[%s1 + $0x160] sm:$0xff]
        %v321 = vld [vmem:[%s1 + $0x168] sm:$0xff]
        %v322 = vld [vmem:[%s1 + $0x170] sm:$0xff]
        %v323 = vld [vmem:[%s1 + $0x178] sm:$0xff]
        %v324 = vld [vmem:[%s1 + $0x180] sm:$0xff]
        %v325 = vld [vmem:[%s1 + $0x188] sm:$0xff]
        %v326 = vld [vmem:[%s1 + $0x190] sm:$0xff]
        %v327 = vld [vmem:[%s1 + $0x198] sm:$0xff]
        %v328 = vld [vmem:[%s1 + $0x1a0] sm:$0xff]
        %v329 = vld [vmem:[%s1 + $0x1a8] sm:$0xff]
        %v330 = vld [vmem:[%s1 + $0x1b0] sm:$0xff]
        %v331 = vld [vmem:[%s1 + $0x1b8] sm:$0xff]
        %v332 = vld [vmem:[%s1 + $0x1c0] sm:$0xff]
        %v333 = vld [vmem:[%s1 + $0x1c8] sm:$0xff]
        %v334 = vld [vmem:[%s1 + $0x1d0] sm:$0xff]
        %v335 = vld [vmem:[%s1 + $0x1d8] sm:$0xff]
        %v336 = vld [vmem:[%s1 + $0x1e0] sm:$0xff]
        %v337 = vld [vmem:[%s1 + $0x1e8] sm:$0xff]
        %v338 = vld [vmem:[%s1 + $0x1f0] sm:$0xff]
        %v339 = vld [vmem:[%s1 + $0x1f8] sm:$0xff]
        %v340 = vld [vmem:[%s1 + $0x200] sm:$0xff]
        %v341 = vld [vmem:[%s1 + $0x208] sm:$0xff]
        %v342 = vld [vmem:[%s1 + $0x210] sm:$0xff]
        %v343 = vld [vmem:[%s1 + $0x218] sm:$0xff]
        %v344 = vld [vmem:[%s1 + $0x220] sm:$0xff]
        %v345 = vld [vmem:[%s1 + $0x228] sm:$0xff]
        %v346 = vld [vmem:[%s1 + $0x230] sm:$0xff]
        %v347 = vld [vmem:[%s1 + $0x238] sm:$0xff]
        %v348 = vld [vmem:[%s1 + $0x240] sm:$0xff]
        %v349 = vld [vmem:[%s1 + $0x248] sm:$0xff]
        %v350 = vld [vmem:[%s1 + $0x250] sm:$0xff]
        %v351 = vld [vmem:[%s1 + $0x258] sm:$0xff]
        %v352 = vld [vmem:[%s1 + $0x260] sm:$0xff]
        %v353 = vld [vmem:[%s1 + $0x268] sm:$0xff]
        %v354 = vld [vmem:[%s1 + $0x270] sm:$0xff]
        %v355 = vld [vmem:[%s1 + $0x278] sm:$0xff]
        %v356 = vld [vmem:[%s1 + $0x280] sm:$0xff]
        %v357 = vld [vmem:[%s1 + $0x288] sm:$0xff]
        %v358 = vld [vmem:[%s1 + $0x290] sm:$0xff]
        %v359 = vld [vmem:[%s1 + $0x298] sm:$0xff]
        %v360 = vld [vmem:[%s1 + $0x2a0] sm:$0xff]
        %v361 = vld [vmem:[%s1 + $0x2a8] sm:$0xff]
        %v362 = vld [vmem:[%s1 + $0x2b0] sm:$0xff]
        %v363 = vld [vmem:[%s1 + $0x2b8] sm:$0xff]
        %v364 = vld [vmem:[%s1 + $0x2c0] sm:$0xff]
        %v365 = vld [vmem:[%s1 + $0x2c8] sm:$0xff]
        %v366 = vld [vmem:[%s1 + $0x2d0] sm:$0xff]
        %v367 = vld [vmem:[%s1 + $0x2d8] sm:$0xff]
        %v368 = vld [vmem:[%s1 + $0x2e0] sm:$0xff]
        %v369 = vld [vmem:[%s1 + $0x2e8] sm:$0xff]
        %v370 = vld [vmem:[%s1 + $0x2f0] sm:$0xff]
        %v371 = vld [vmem:[%s1 + $0x2f8] sm:$0xff]
        %v372 = vld [vmem:[%s1 + $0x300] sm:$0xff]
        %v373 = vld [vmem:[%s1 + $0x308] sm:$0xff]
        %v374 = vld [vmem:[%s1 + $0x310] sm:$0xff]
        %v375 = vld [vmem:[%s1 + $0x318] sm:$0xff]
        %v376 = vld [vmem:[%s1 + $0x320] sm:$0xff]
        %v377 = vld [vmem:[%s1 + $0x328] sm:$0xff]
        %v378 = vld [vmem:[%s1 + $0x330] sm:$0xff]
        %v379 = vld [vmem:[%s1 + $0x338] sm:$0xff]
        %v380 = vld [vmem:[%s1 + $0x340] sm:$0xff]
        %v381 = vld [vmem:[%s1 + $0x348] sm:$0xff]
        %v382 = vld [vmem:[%s1 + $0x350] sm:$0xff]
        %v383 = vld [vmem:[%s1 + $0x358] sm:$0xff]
        %v384 = vld [vmem:[%s1 + $0x360] sm:$0xff]
        %v385 = vld [vmem:[%s1 + $0x368] sm:$0xff]
        %v386 = vld [vmem:[%s1 + $0x370] sm:$0xff]
        %v387 = vld [vmem:[%s1 + $0x378] sm:$0xff]
        %v388 = vld [vmem:[%s1 + $0x380] sm:$0xff]
        %v389 = vld [vmem:[%s1 + $0x388] sm:$0xff]
        %v390 = vld [vmem:[%s1 + $0x390] sm:$0xff]
        %v391 = vld [vmem:[%s1 + $0x398] sm:$0xff]
        %v392 = vld [vmem:[%s1 + $0x3a0] sm:$0xff]
        %v393 = vld [vmem:[%s1 + $0x3a8] sm:$0xff]
        %v394 = vld [vmem:[%s1 + $0x3b0] sm:$0xff]
        %v395 = vld [vmem:[%s1 + $0x3b8] sm:$0xff]
        %v396 = vld [vmem:[%s1 + $0x3c0] sm:$0xff]
        %v397 = vld [vmem:[%s1 + $0x3c8] sm:$0xff]
        %v398 = vld [vmem:[%s1 + $0x3d0] sm:$0xff]
        %v399 = vld [vmem:[%s1 + $0x3d8] sm:$0xff]
        %v400 = vld [vmem:[%s1 + $0x3e0] sm:$0xff]
        %v401 = vld [vmem:[%s1 + $0x3e8] sm:$0xff]
        %v402 = vld [vmem:[%s1 + $0x3f0] sm:$0xff]
        %v403 = vld [vmem:[%s1 + $0x3f8] sm:$0xff]
        %404 = vmatprep.subr.mxu0 0.0
        %405 = vmatpush1.msra.mxu0 %v291
        %406 = vmatprep.subr.mxu0 0.0
        %407 = vmatpush1.msra.mxu0 %v290
        %408 = vmatprep.subr.mxu0 0.0
        %409 = vmatpush1.msra.mxu0 %v289
        %410 = vmatprep.subr.mxu0 0.0
        %411 = vmatpush1.msra.mxu0 %v288
        %412 = vmatprep.subr.mxu0 0.0
        %413 = vmatpush1.msra.mxu0 %v287
        %414 = vmatprep.subr.mxu0 0.0
        %415 = vmatpush1.msra.mxu0 %v286
        %416 = vmatprep.subr.mxu0 0.0
        %417 = vmatpush1.msra.mxu0 %v285
        %418 = vmatprep.subr.mxu0 0.0
        %419 = vmatpush1.msra.mxu0 %v284
        %420 = vmatprep.subr.mxu0 0.0
        %421 = vmatpush1.msra.mxu0 %v283
        %422 = vmatprep.subr.mxu0 0.0
        %423 = vmatpush1.msra.mxu0 %v282
        %424 = vmatprep.subr.mxu0 0.0
        %425 = vmatpush1.msra.mxu0 %v281
        %426 = vmatprep.subr.mxu0 0.0
        %427 = vmatpush1.msra.mxu0 %v280
        %428 = vmatprep.subr.mxu0 0.0
        %429 = vmatpush1.msra.mxu0 %v279
        %430 = vmatprep.subr.mxu0 0.0
        %431 = vmatpush1.msra.mxu0 %v278
        %432 = vmatprep.subr.mxu0 0.0
        %433 = vmatpush1.msra.mxu0 %v277
        %434 = vmatprep.subr.mxu0 0.0
        %435 = vmatpush1.msra.mxu0 %v276
        %436 = vmatprep.subr.mxu0 0.0
        %437 = vmatpush2.msra.mxu0 %v307
        %438 = vmatprep.subr.mxu0 0.0
        %439 = vmatpush2.msra.mxu0 %v306
        %440 = vmatprep.subr.mxu0 0.0
        %441 = vmatpush2.msra.mxu0 %v305
        %442 = vmatprep.subr.mxu0 0.0
        %443 = vmatpush2.msra.mxu0 %v304
        %444 = vmatprep.subr.mxu0 0.0
        %445 = vmatpush2.msra.mxu0 %v303
        %446 = vmatprep.subr.mxu0 0.0
        %447 = vmatpush2.msra.mxu0 %v302
        %448 = vmatprep.subr.mxu0 0.0
        %449 = vmatpush2.msra.mxu0 %v301
        %450 = vmatprep.subr.mxu0 0.0
        %451 = vmatpush2.msra.mxu0 %v300
        %452 = vmatprep.subr.mxu0 0.0
        %453 = vmatpush2.msra.mxu0 %v299
        %454 = vmatprep.subr.mxu0 0.0
        %455 = vmatpush2.msra.mxu0 %v298
        %456 = vmatprep.subr.mxu0 0.0
        %457 = vmatpush2.msra.mxu0 %v297
        %458 = vmatprep.subr.mxu0 0.0
        %459 = vmatpush2.msra.mxu0 %v296
        %460 = vmatprep.subr.mxu0 0.0
        %461 = vmatpush2.msra.mxu0 %v295
        %462 = vmatprep.subr.mxu0 0.0
        %463 = vmatpush2.msra.mxu0 %v294
        %464 = vmatprep.subr.mxu0 0.0
        %465 = vmatpush2.msra.mxu0 %v293
        %466 = vmatprep.subr.mxu0 0.0
        %467 = vmatpush2.msra.mxu0 %v292
        %468 = vmatprep.mubr.f32.mxu0 %v149
        %469 = vmatmul.mubr.f32.gmra.mxu0 %v148
        %v470 = vpop.f32.mrf.mxu0
        %v471 = vadd.f32 0.0, %v470
        %v472 = vpop.f32.mrf.mxu0
        %473 = vmatprep.mubr.f32.mxu0 %v157
        %474 = vmatmul.mubr.f32.gmra.mxu0 %v156
        %v475 = vpop.f32.mrf.mxu0
        %v476 = vadd.f32 0.0, %v475
        %v477 = vpop.f32.mrf.mxu0
        %478 = vmatprep.mubr.f32.mxu0 %v165
        %479 = vmatmul.mubr.f32.gmra.mxu0 %v164
        %v480 = vpop.f32.mrf.mxu0
        %v481 = vadd.f32 0.0, %v480
        %v482 = vpop.f32.mrf.mxu0
        %483 = vmatprep.mubr.f32.mxu0 %v173
        %484 = vmatmul.mubr.f32.gmra.mxu0 %v172
        %v485 = vpop.f32.mrf.mxu0
        %v486 = vadd.f32 0.0, %v485
        %v487 = vpop.f32.mrf.mxu0
        %488 = vmatprep.mubr.f32.mxu0 %v181
        %489 = vmatmul.mubr.f32.gmra.mxu0 %v180
        %v490 = vpop.f32.mrf.mxu0
        %v491 = vadd.f32 0.0, %v490
        %v492 = vpop.f32.mrf.mxu0
        %493 = vmatprep.mubr.f32.mxu0 %v189
        %494 = vmatmul.mubr.f32.gmra.mxu0 %v188
        %v495 = vpop.f32.mrf.mxu0
        %v496 = vadd.f32 0.0, %v495
        %v497 = vpop.f32.mrf.mxu0
        %498 = vmatprep.mubr.f32.mxu0 %v197
        %499 = vmatmul.mubr.f32.gmra.mxu0 %v196
        %v500 = vpop.f32.mrf.mxu0
        %v501 = vadd.f32 0.0, %v500
        %v502 = vpop.f32.mrf.mxu0
        %503 = vmatprep.mubr.f32.mxu0 %v205
        %504 = vmatmul.mubr.f32.gmra.mxu0 %v204
        %v505 = vpop.f32.mrf.mxu0
        %v506 = vadd.f32 0.0, %v505
        %v507 = vpop.f32.mrf.mxu0
        %508 = vmatprep.mubr.f32.mxu0 %v213
        %509 = vmatmul.mubr.f32.gmra.mxu0 %v212
        %v510 = vpop.f32.mrf.mxu0
        %v511 = vadd.f32 0.0, %v510
        %v512 = vpop.f32.mrf.mxu0
        %513 = vmatprep.mubr.f32.mxu0 %v221
        %514 = vmatmul.mubr.f32.gmra.mxu0 %v220
        %v515 = vpop.f32.mrf.mxu0
        %v516 = vadd.f32 0.0, %v515
        %v517 = vpop.f32.mrf.mxu0
        %518 = vmatprep.mubr.f32.mxu0 %v229
        %519 = vmatmul.mubr.f32.gmra.mxu0 %v228
        %v520 = vpop.f32.mrf.mxu0
        %v521 = vadd.f32 0.0, %v520
        %v522 = vpop.f32.mrf.mxu0
        %523 = vmatprep.mubr.f32.mxu0 %v237
        %524 = vmatmul.mubr.f32.gmra.mxu0 %v236
        %v525 = vpop.f32.mrf.mxu0
        %v526 = vadd.f32 0.0, %v525
        %v527 = vpop.f32.mrf.mxu0
        %528 = vmatprep.mubr.f32.mxu0 %v245
        %529 = vmatmul.mubr.f32.gmra.mxu0 %v244
        %v530 = vpop.f32.mrf.mxu0
        %v531 = vadd.f32 0.0, %v530
        %v532 = vpop.f32.mrf.mxu0
        %533 = vmatprep.mubr.f32.mxu0 %v253
        %534 = vmatmul.mubr.f32.gmra.mxu0 %v252
        %v535 = vpop.f32.mrf.mxu0
        %v536 = vadd.f32 0.0, %v535
        %v537 = vpop.f32.mrf.mxu0
        %538 = vmatprep.mubr.f32.mxu0 %v261
        %539 = vmatmul.mubr.f32.gmra.mxu0 %v260
        %v540 = vpop.f32.mrf.mxu0
        %v541 = vadd.f32 0.0, %v540
        %v542 = vpop.f32.mrf.mxu0
        %543 = vmatprep.mubr.f32.mxu0 %v269
        %544 = vmatmul.mubr.f32.gmra.mxu0 %v268
        %v545 = vpop.f32.mrf.mxu0
        %v546 = vadd.f32 0.0, %v545
        %v547 = vpop.f32.mrf.mxu0
        %548 = vdwg.mxu0
        %549 = vmatprep.subr.mxu0 0.0
        %550 = vmatpush1.msra.mxu0 %v323
        %551 = vmatprep.subr.mxu0 0.0
        %552 = vmatpush1.msra.mxu0 %v322
        %553 = vmatprep.subr.mxu0 0.0
        %554 = vmatpush1.msra.mxu0 %v321
        %555 = vmatprep.subr.mxu0 0.0
        %556 = vmatpush1.msra.mxu0 %v320
        %557 = vmatprep.subr.mxu0 0.0
        %558 = vmatpush1.msra.mxu0 %v319
        %559 = vmatprep.subr.mxu0 0.0
        %560 = vmatpush1.msra.mxu0 %v318
        %561 = vmatprep.subr.mxu0 0.0
        %562 = vmatpush1.msra.mxu0 %v317
        %563 = vmatprep.subr.mxu0 0.0
        %564 = vmatpush1.msra.mxu0 %v316
        %565 = vmatprep.subr.mxu0 0.0
        %566 = vmatpush1.msra.mxu0 %v315
        %567 = vmatprep.subr.mxu0 0.0
        %568 = vmatpush1.msra.mxu0 %v314
        %569 = vmatprep.subr.mxu0 0.0
        %570 = vmatpush1.msra.mxu0 %v313
        %571 = vmatprep.subr.mxu0 0.0
        %572 = vmatpush1.msra.mxu0 %v312
        %573 = vmatprep.subr.mxu0 0.0
        %574 = vmatpush1.msra.mxu0 %v311
        %575 = vmatprep.subr.mxu0 0.0
        %576 = vmatpush1.msra.mxu0 %v310
        %577 = vmatprep.subr.mxu0 0.0
        %578 = vmatpush1.msra.mxu0 %v309
        %579 = vmatprep.subr.mxu0 0.0
        %580 = vmatpush1.msra.mxu0 %v308
        %581 = vmatprep.subr.mxu0 0.0
        %582 = vmatpush2.msra.mxu0 %v339
        %583 = vmatprep.subr.mxu0 0.0
        %584 = vmatpush2.msra.mxu0 %v338
        %585 = vmatprep.subr.mxu0 0.0
        %586 = vmatpush2.msra.mxu0 %v337
        %587 = vmatprep.subr.mxu0 0.0
        %588 = vmatpush2.msra.mxu0 %v336
        %589 = vmatprep.subr.mxu0 0.0
        %590 = vmatpush2.msra.mxu0 %v335
        %591 = vmatprep.subr.mxu0 0.0
        %592 = vmatpush2.msra.mxu0 %v334
        %593 = vmatprep.subr.mxu0 0.0
        %594 = vmatpush2.msra.mxu0 %v333
        %595 = vmatprep.subr.mxu0 0.0
        %596 = vmatpush2.msra.mxu0 %v332
        %597 = vmatprep.subr.mxu0 0.0
        %598 = vmatpush2.msra.mxu0 %v331
        %599 = vmatprep.subr.mxu0 0.0
        %600 = vmatpush2.msra.mxu0 %v330
        %601 = vmatprep.subr.mxu0 0.0
        %602 = vmatpush2.msra.mxu0 %v329
        %603 = vmatprep.subr.mxu0 0.0
        %604 = vmatpush2.msra.mxu0 %v328
        %605 = vmatprep.subr.mxu0 0.0
        %606 = vmatpush2.msra.mxu0 %v327
        %607 = vmatprep.subr.mxu0 0.0
        %608 = vmatpush2.msra.mxu0 %v326
        %609 = vmatprep.subr.mxu0 0.0
        %610 = vmatpush2.msra.mxu0 %v325
        %611 = vmatprep.subr.mxu0 0.0
        %612 = vmatpush2.msra.mxu0 %v324
        %613 = vmatprep.mubr.f32.mxu0 %v151
        %614 = vmatmul.mubr.f32.gmra.mxu0 %v150
        %v615 = vpop.f32.mrf.mxu0
        %v616 = vadd.f32 %v471, %v615
        %v617 = vpop.f32.mrf.mxu0
        %618 = vmatprep.mubr.f32.mxu0 %v159
        %619 = vmatmul.mubr.f32.gmra.mxu0 %v158
        %v620 = vpop.f32.mrf.mxu0
        %v621 = vadd.f32 %v476, %v620
        %v622 = vpop.f32.mrf.mxu0
        %623 = vmatprep.mubr.f32.mxu0 %v167
        %624 = vmatmul.mubr.f32.gmra.mxu0 %v166
        %v625 = vpop.f32.mrf.mxu0
        %v626 = vadd.f32 %v481, %v625
        %v627 = vpop.f32.mrf.mxu0
        %628 = vmatprep.mubr.f32.mxu0 %v175
        %629 = vmatmul.mubr.f32.gmra.mxu0 %v174
        %v630 = vpop.f32.mrf.mxu0
        %v631 = vadd.f32 %v486, %v630
        %v632 = vpop.f32.mrf.mxu0
        %633 = vmatprep.mubr.f32.mxu0 %v183
        %634 = vmatmul.mubr.f32.gmra.mxu0 %v182
        %v635 = vpop.f32.mrf.mxu0
        %v636 = vadd.f32 %v491, %v635
        %v637 = vpop.f32.mrf.mxu0
        %638 = vmatprep.mubr.f32.mxu0 %v191
        %639 = vmatmul.mubr.f32.gmra.mxu0 %v190
        %v640 = vpop.f32.mrf.mxu0
        %v641 = vadd.f32 %v496, %v640
        %v642 = vpop.f32.mrf.mxu0
        %643 = vmatprep.mubr.f32.mxu0 %v199
        %644 = vmatmul.mubr.f32.gmra.mxu0 %v198
        %v645 = vpop.f32.mrf.mxu0
        %v646 = vadd.f32 %v501, %v645
        %v647 = vpop.f32.mrf.mxu0
        %648 = vmatprep.mubr.f32.mxu0 %v207
        %649 = vmatmul.mubr.f32.gmra.mxu0 %v206
        %v650 = vpop.f32.mrf.mxu0
        %v651 = vadd.f32 %v506, %v650
        %v652 = vpop.f32.mrf.mxu0
        %653 = vmatprep.mubr.f32.mxu0 %v215
        %654 = vmatmul.mubr.f32.gmra.mxu0 %v214
        %v655 = vpop.f32.mrf.mxu0
        %v656 = vadd.f32 %v511, %v655
        %v657 = vpop.f32.mrf.mxu0
        %658 = vmatprep.mubr.f32.mxu0 %v223
        %659 = vmatmul.mubr.f32.gmra.mxu0 %v222
        %v660 = vpop.f32.mrf.mxu0
        %v661 = vadd.f32 %v516, %v660
        %v662 = vpop.f32.mrf.mxu0
        %663 = vmatprep.mubr.f32.mxu0 %v231
        %664 = vmatmul.mubr.f32.gmra.mxu0 %v230
        %v665 = vpop.f32.mrf.mxu0
        %v666 = vadd.f32 %v521, %v665
        %v667 = vpop.f32.mrf.mxu0
        %668 = vmatprep.mubr.f32.mxu0 %v239
        %669 = vmatmul.mubr.f32.gmra.mxu0 %v238
        %v670 = vpop.f32.mrf.mxu0
        %v671 = vadd.f32 %v526, %v670
        %v672 = vpop.f32.mrf.mxu0
        %673 = vmatprep.mubr.f32.mxu0 %v247
        %674 = vmatmul.mubr.f32.gmra.mxu0 %v246
        %v675 = vpop.f32.mrf.mxu0
        %v676 = vadd.f32 %v531, %v675
        %v677 = vpop.f32.mrf.mxu0
        %678 = vmatprep.mubr.f32.mxu0 %v255
        %679 = vmatmul.mubr.f32.gmra.mxu0 %v254
        %v680 = vpop.f32.mrf.mxu0
        %v681 = vadd.f32 %v536, %v680
        %v682 = vpop.f32.mrf.mxu0
        %683 = vmatprep.mubr.f32.mxu0 %v263
        %684 = vmatmul.mubr.f32.gmra.mxu0 %v262
        %v685 = vpop.f32.mrf.mxu0
        %v686 = vadd.f32 %v541, %v685
        %v687 = vpop.f32.mrf.mxu0
        %688 = vmatprep.mubr.f32.mxu0 %v271
        %689 = vmatmul.mubr.f32.gmra.mxu0 %v270
        %v690 = vpop.f32.mrf.mxu0
        %v691 = vadd.f32 %v546, %v690
        %v692 = vpop.f32.mrf.mxu0
        %693 = vdwg.mxu0
        %694 = vmatprep.subr.mxu0 0.0
        %695 = vmatpush1.msra.mxu0 %v355
        %696 = vmatprep.subr.mxu0 0.0
        %697 = vmatpush1.msra.mxu0 %v354
        %698 = vmatprep.subr.mxu0 0.0
        %699 = vmatpush1.msra.mxu0 %v353
        %700 = vmatprep.subr.mxu0 0.0
        %701 = vmatpush1.msra.mxu0 %v352
        %702 = vmatprep.subr.mxu0 0.0
        %703 = vmatpush1.msra.mxu0 %v351
        %704 = vmatprep.subr.mxu0 0.0
        %705 = vmatpush1.msra.mxu0 %v350
        %706 = vmatprep.subr.mxu0 0.0
        %707 = vmatpush1.msra.mxu0 %v349
        %708 = vmatprep.subr.mxu0 0.0
        %709 = vmatpush1.msra.mxu0 %v348
        %710 = vmatprep.subr.mxu0 0.0
        %711 = vmatpush1.msra.mxu0 %v347
        %712 = vmatprep.subr.mxu0 0.0
        %713 = vmatpush1.msra.mxu0 %v346
        %714 = vmatprep.subr.mxu0 0.0
        %715 = vmatpush1.msra.mxu0 %v345
        %716 = vmatprep.subr.mxu0 0.0
        %717 = vmatpush1.msra.mxu0 %v344
        %718 = vmatprep.subr.mxu0 0.0
        %719 = vmatpush1.msra.mxu0 %v343
        %720 = vmatprep.subr.mxu0 0.0
        %721 = vmatpush1.msra.mxu0 %v342
        %722 = vmatprep.subr.mxu0 0.0
        %723 = vmatpush1.msra.mxu0 %v341
        %724 = vmatprep.subr.mxu0 0.0
        %725 = vmatpush1.msra.mxu0 %v340
        %726 = vmatprep.subr.mxu0 0.0
        %727 = vmatpush2.msra.mxu0 %v371
        %728 = vmatprep.subr.mxu0 0.0
        %729 = vmatpush2.msra.mxu0 %v370
        %730 = vmatprep.subr.mxu0 0.0
        %731 = vmatpush2.msra.mxu0 %v369
        %732 = vmatprep.subr.mxu0 0.0
        %733 = vmatpush2.msra.mxu0 %v368
        %734 = vmatprep.subr.mxu0 0.0
        %735 = vmatpush2.msra.mxu0 %v367
        %736 = vmatprep.subr.mxu0 0.0
        %737 = vmatpush2.msra.mxu0 %v366
        %738 = vmatprep.subr.mxu0 0.0
        %739 = vmatpush2.msra.mxu0 %v365
        %740 = vmatprep.subr.mxu0 0.0
        %741 = vmatpush2.msra.mxu0 %v364
        %742 = vmatprep.subr.mxu0 0.0
        %743 = vmatpush2.msra.mxu0 %v363
        %744 = vmatprep.subr.mxu0 0.0
        %745 = vmatpush2.msra.mxu0 %v362
        %746 = vmatprep.subr.mxu0 0.0
        %747 = vmatpush2.msra.mxu0 %v361
        %748 = vmatprep.subr.mxu0 0.0
        %749 = vmatpush2.msra.mxu0 %v360
        %750 = vmatprep.subr.mxu0 0.0
        %751 = vmatpush2.msra.mxu0 %v359
        %752 = vmatprep.subr.mxu0 0.0
        %753 = vmatpush2.msra.mxu0 %v358
        %754 = vmatprep.subr.mxu0 0.0
        %755 = vmatpush2.msra.mxu0 %v357
        %756 = vmatprep.subr.mxu0 0.0
        %757 = vmatpush2.msra.mxu0 %v356
        %758 = vmatprep.mubr.f32.mxu0 %v153
        %759 = vmatmul.mubr.f32.gmra.mxu0 %v152
        %v760 = vpop.f32.mrf.mxu0
        %v761 = vadd.f32 %v616, %v760
        %v762 = vpop.f32.mrf.mxu0
        %763 = vmatprep.mubr.f32.mxu0 %v161
        %764 = vmatmul.mubr.f32.gmra.mxu0 %v160
        %v765 = vpop.f32.mrf.mxu0
        %v766 = vadd.f32 %v621, %v765
        %v767 = vpop.f32.mrf.mxu0
        %768 = vmatprep.mubr.f32.mxu0 %v169
        %769 = vmatmul.mubr.f32.gmra.mxu0 %v168
        %v770 = vpop.f32.mrf.mxu0
        %v771 = vadd.f32 %v626, %v770
        %v772 = vpop.f32.mrf.mxu0
        %773 = vmatprep.mubr.f32.mxu0 %v177
        %774 = vmatmul.mubr.f32.gmra.mxu0 %v176
        %v775 = vpop.f32.mrf.mxu0
        %v776 = vadd.f32 %v631, %v775
        %v777 = vpop.f32.mrf.mxu0
        %778 = vmatprep.mubr.f32.mxu0 %v185
        %779 = vmatmul.mubr.f32.gmra.mxu0 %v184
        %v780 = vpop.f32.mrf.mxu0
        %v781 = vadd.f32 %v636, %v780
        %v782 = vpop.f32.mrf.mxu0
        %783 = vmatprep.mubr.f32.mxu0 %v193
        %784 = vmatmul.mubr.f32.gmra.mxu0 %v192
        %v785 = vpop.f32.mrf.mxu0
        %v786 = vadd.f32 %v641, %v785
        %v787 = vpop.f32.mrf.mxu0
        %788 = vmatprep.mubr.f32.mxu0 %v201
        %789 = vmatmul.mubr.f32.gmra.mxu0 %v200
        %v790 = vpop.f32.mrf.mxu0
        %v791 = vadd.f32 %v646, %v790
        %v792 = vpop.f32.mrf.mxu0
        %793 = vmatprep.mubr.f32.mxu0 %v209
        %794 = vmatmul.mubr.f32.gmra.mxu0 %v208
        %v795 = vpop.f32.mrf.mxu0
        %v796 = vadd.f32 %v651, %v795
        %v797 = vpop.f32.mrf.mxu0
        %798 = vmatprep.mubr.f32.mxu0 %v217
        %799 = vmatmul.mubr.f32.gmra.mxu0 %v216
        %v800 = vpop.f32.mrf.mxu0
        %v801 = vadd.f32 %v656, %v800
        %v802 = vpop.f32.mrf.mxu0
        %803 = vmatprep.mubr.f32.mxu0 %v225
        %804 = vmatmul.mubr.f32.gmra.mxu0 %v224
        %v805 = vpop.f32.mrf.mxu0
        %v806 = vadd.f32 %v661, %v805
        %v807 = vpop.f32.mrf.mxu0
        %808 = vmatprep.mubr.f32.mxu0 %v233
        %809 = vmatmul.mubr.f32.gmra.mxu0 %v232
        %v810 = vpop.f32.mrf.mxu0
        %v811 = vadd.f32 %v666, %v810
        %v812 = vpop.f32.mrf.mxu0
        %813 = vmatprep.mubr.f32.mxu0 %v241
        %814 = vmatmul.mubr.f32.gmra.mxu0 %v240
        %v815 = vpop.f32.mrf.mxu0
        %v816 = vadd.f32 %v671, %v815
        %v817 = vpop.f32.mrf.mxu0
        %818 = vmatprep.mubr.f32.mxu0 %v249
        %819 = vmatmul.mubr.f32.gmra.mxu0 %v248
        %v820 = vpop.f32.mrf.mxu0
        %v821 = vadd.f32 %v676, %v820
        %v822 = vpop.f32.mrf.mxu0
        %823 = vmatprep.mubr.f32.mxu0 %v257
        %824 = vmatmul.mubr.f32.gmra.mxu0 %v256
        %v825 = vpop.f32.mrf.mxu0
        %v826 = vadd.f32 %v681, %v825
        %v827 = vpop.f32.mrf.mxu0
        %828 = vmatprep.mubr.f32.mxu0 %v265
        %829 = vmatmul.mubr.f32.gmra.mxu0 %v264
        %v830 = vpop.f32.mrf.mxu0
        %v831 = vadd.f32 %v686, %v830
        %v832 = vpop.f32.mrf.mxu0
        %833 = vmatprep.mubr.f32.mxu0 %v273
        %834 = vmatmul.mubr.f32.gmra.mxu0 %v272
        %v835 = vpop.f32.mrf.mxu0
        %v836 = vadd.f32 %v691, %v835
        %v837 = vpop.f32.mrf.mxu0
        %838 = vdwg.mxu0
        %839 = vmatprep.subr.mxu0 0.0
        %840 = vmatpush1.msra.mxu0 %v387
        %841 = vmatprep.subr.mxu0 0.0
        %842 = vmatpush1.msra.mxu0 %v386
        %843 = vmatprep.subr.mxu0 0.0
        %844 = vmatpush1.msra.mxu0 %v385
        %845 = vmatprep.subr.mxu0 0.0
        %846 = vmatpush1.msra.mxu0 %v384
        %847 = vmatprep.subr.mxu0 0.0
        %848 = vmatpush1.msra.mxu0 %v383
        %849 = vmatprep.subr.mxu0 0.0
        %850 = vmatpush1.msra.mxu0 %v382
        %851 = vmatprep.subr.mxu0 0.0
        %852 = vmatpush1.msra.mxu0 %v381
        %853 = vmatprep.subr.mxu0 0.0
        %854 = vmatpush1.msra.mxu0 %v380
        %855 = vmatprep.subr.mxu0 0.0
        %856 = vmatpush1.msra.mxu0 %v379
        %857 = vmatprep.subr.mxu0 0.0
        %858 = vmatpush1.msra.mxu0 %v378
        %859 = vmatprep.subr.mxu0 0.0
        %860 = vmatpush1.msra.mxu0 %v377
        %861 = vmatprep.subr.mxu0 0.0
        %862 = vmatpush1.msra.mxu0 %v376
        %863 = vmatprep.subr.mxu0 0.0
        %864 = vmatpush1.msra.mxu0 %v375
        %865 = vmatprep.subr.mxu0 0.0
        %866 = vmatpush1.msra.mxu0 %v374
        %867 = vmatprep.subr.mxu0 0.0
        %868 = vmatpush1.msra.mxu0 %v373
        %869 = vmatprep.subr.mxu0 0.0
        %870 = vmatpush1.msra.mxu0 %v372
        %871 = vmatprep.subr.mxu0 0.0
        %872 = vmatpush2.msra.mxu0 %v403
        %873 = vmatprep.subr.mxu0 0.0
        %874 = vmatpush2.msra.mxu0 %v402
        %875 = vmatprep.subr.mxu0 0.0
        %876 = vmatpush2.msra.mxu0 %v401
        %877 = vmatprep.subr.mxu0 0.0
        %878 = vmatpush2.msra.mxu0 %v400
        %879 = vmatprep.subr.mxu0 0.0
        %880 = vmatpush2.msra.mxu0 %v399
        %881 = vmatprep.subr.mxu0 0.0
        %882 = vmatpush2.msra.mxu0 %v398
        %883 = vmatprep.subr.mxu0 0.0
        %884 = vmatpush2.msra.mxu0 %v397
        %885 = vmatprep.subr.mxu0 0.0
        %886 = vmatpush2.msra.mxu0 %v396
        %887 = vmatprep.subr.mxu0 0.0
        %888 = vmatpush2.msra.mxu0 %v395
        %889 = vmatprep.subr.mxu0 0.0
        %890 = vmatpush2.msra.mxu0 %v394
        %891 = vmatprep.subr.mxu0 0.0
        %892 = vmatpush2.msra.mxu0 %v393
        %893 = vmatprep.subr.mxu0 0.0
        %894 = vmatpush2.msra.mxu0 %v392
        %895 = vmatprep.subr.mxu0 0.0
        %896 = vmatpush2.msra.mxu0 %v391
        %897 = vmatprep.subr.mxu0 0.0
        %898 = vmatpush2.msra.mxu0 %v390
        %899 = vmatprep.subr.mxu0 0.0
        %900 = vmatpush2.msra.mxu0 %v389
        %901 = vmatprep.subr.mxu0 0.0
        %902 = vmatpush2.msra.mxu0 %v388
        %903 = vmatprep.mubr.f32.mxu0 %v155
        %904 = vmatmul.mubr.f32.gmra.mxu0 %v154
        %v905 = vpop.f32.mrf.mxu0
        %v906 = vadd.f32 %v761, %v905
        %v907 = vpop.f32.mrf.mxu0
        %908 = vmatprep.mubr.f32.mxu0 %v163
        %909 = vmatmul.mubr.f32.gmra.mxu0 %v162
        %v910 = vpop.f32.mrf.mxu0
        %v911 = vadd.f32 %v766, %v910
        %v912 = vpop.f32.mrf.mxu0
        %913 = vmatprep.mubr.f32.mxu0 %v171
        %914 = vmatmul.mubr.f32.gmra.mxu0 %v170
        %v915 = vpop.f32.mrf.mxu0
        %v916 = vadd.f32 %v771, %v915
        %v917 = vpop.f32.mrf.mxu0
        %918 = vmatprep.mubr.f32.mxu0 %v179
        %919 = vmatmul.mubr.f32.gmra.mxu0 %v178
        %v920 = vpop.f32.mrf.mxu0
        %v921 = vadd.f32 %v776, %v920
        %v922 = vpop.f32.mrf.mxu0
        %923 = vmatprep.mubr.f32.mxu0 %v187
        %924 = vmatmul.mubr.f32.gmra.mxu0 %v186
        %v925 = vpop.f32.mrf.mxu0
        %v926 = vadd.f32 %v781, %v925
        %v927 = vpop.f32.mrf.mxu0
        %928 = vmatprep.mubr.f32.mxu0 %v195
        %929 = vmatmul.mubr.f32.gmra.mxu0 %v194
        %v930 = vpop.f32.mrf.mxu0
        %v931 = vadd.f32 %v786, %v930
        %v932 = vpop.f32.mrf.mxu0
        %933 = vmatprep.mubr.f32.mxu0 %v203
        %934 = vmatmul.mubr.f32.gmra.mxu0 %v202
        %v935 = vpop.f32.mrf.mxu0
        %v936 = vadd.f32 %v791, %v935
        %v937 = vpop.f32.mrf.mxu0
        %938 = vmatprep.mubr.f32.mxu0 %v211
        %939 = vmatmul.mubr.f32.gmra.mxu0 %v210
        %v940 = vpop.f32.mrf.mxu0
        %v941 = vadd.f32 %v796, %v940
        %v942 = vpop.f32.mrf.mxu0
        %943 = vmatprep.mubr.f32.mxu0 %v219
        %944 = vmatmul.mubr.f32.gmra.mxu0 %v218
        %v945 = vpop.f32.mrf.mxu0
        %v946 = vadd.f32 %v801, %v945
        %v947 = vpop.f32.mrf.mxu0
        %948 = vmatprep.mubr.f32.mxu0 %v227
        %949 = vmatmul.mubr.f32.gmra.mxu0 %v226
        %v950 = vpop.f32.mrf.mxu0
        %v951 = vadd.f32 %v806, %v950
        %v952 = vpop.f32.mrf.mxu0
        %953 = vmatprep.mubr.f32.mxu0 %v235
        %954 = vmatmul.mubr.f32.gmra.mxu0 %v234
        %v955 = vpop.f32.mrf.mxu0
        %v956 = vadd.f32 %v811, %v955
        %v957 = vpop.f32.mrf.mxu0
        %958 = vmatprep.mubr.f32.mxu0 %v243
        %959 = vmatmul.mubr.f32.gmra.mxu0 %v242
        %v960 = vpop.f32.mrf.mxu0
        %v961 = vadd.f32 %v816, %v960
        %v962 = vpop.f32.mrf.mxu0
        %963 = vmatprep.mubr.f32.mxu0 %v251
        %964 = vmatmul.mubr.f32.gmra.mxu0 %v250
        %v965 = vpop.f32.mrf.mxu0
        %v966 = vadd.f32 %v821, %v965
        %v967 = vpop.f32.mrf.mxu0
        %968 = vmatprep.mubr.f32.mxu0 %v259
        %969 = vmatmul.mubr.f32.gmra.mxu0 %v258
        %v970 = vpop.f32.mrf.mxu0
        %v971 = vadd.f32 %v826, %v970
        %v972 = vpop.f32.mrf.mxu0
        %973 = vmatprep.mubr.f32.mxu0 %v267
        %974 = vmatmul.mubr.f32.gmra.mxu0 %v266
        %v975 = vpop.f32.mrf.mxu0
        %v976 = vadd.f32 %v831, %v975
        %v977 = vpop.f32.mrf.mxu0
        %978 = vmatprep.mubr.f32.mxu0 %v275
        %979 = vmatmul.mubr.f32.gmra.mxu0 %v274
        %v980 = vpop.f32.mrf.mxu0
        %v981 = vadd.f32 %v836, %v980
        %v982 = vpop.f32.mrf.mxu0
        %983 = vdwg.mxu0
        %984 = vst [vmem:[%s139] sm:$0xff] %v906
        %985 = vst [vmem:[%s139 + $0x8] sm:$0xff] %v911
        %986 = vst [vmem:[%s139 + $0x10] sm:$0xff] %v916
        %987 = vst [vmem:[%s139 + $0x18] sm:$0xff] %v921
        %988 = vst [vmem:[%s139 + $0x20] sm:$0xff] %v926
        %989 = vst [vmem:[%s139 + $0x28] sm:$0xff] %v931
        %990 = vst [vmem:[%s139 + $0x30] sm:$0xff] %v936
        %991 = vst [vmem:[%s139 + $0x38] sm:$0xff] %v941
        %992 = vst [vmem:[%s139 + $0x40] sm:$0xff] %v946
        %993 = vst [vmem:[%s139 + $0x48] sm:$0xff] %v951
        %994 = vst [vmem:[%s139 + $0x50] sm:$0xff] %v956
        %995 = vst [vmem:[%s139 + $0x58] sm:$0xff] %v961
        %996 = vst [vmem:[%s139 + $0x60] sm:$0xff] %v966
        %997 = vst [vmem:[%s139 + $0x68] sm:$0xff] %v971
        %998 = vst [vmem:[%s139 + $0x70] sm:$0xff] %v976
        %999 = vst [vmem:[%s139 + $0x78] sm:$0xff] %v981
        %s1000 = sand.u32 %s71, 1
        %s1001 = scalar_lea.sflag [#allocation3], %s1000
        %s1002 = sand.u32 %s71, 1
        %s1003 = smul.addr %s1002, 128
        %s1004 = scalar_lea.vmem [#allocation2], %s1003
        // Predicated region
        $region29: #{image_merging.1} parent=27 // pred_check
          %p1005 = pneg %p81
        $region30: #{image_merging.1} parent=27 // pred_check_branch
          %1007 = sbr.rel (%p1005) target = $region32
        $region31: #{image_merging.1} parent=27 // pred_region
          %s1008 = smul.u32 16, %s16
          %s1010 = ssub.s32 2048, 2048
          %1011 = vsyncadd %s1001, %s1010
          %s1012 = smul.addr %s1008, 128
          %s1013 = scalar_lea.hbm %s2, %s1012
          %s1014 = sshll.u32 %s1004, 4
          %s1015 = int_to_ptr.vmem [resolvable:$true] %s1014
          %1020 = dma.vmem_to_hbm [thread:$0]  %s1015, 2048, %s1013, %s1001, 128, 128, 8
        $region32: #{image_merging.1} parent=27 // pred_fallthru
          _
      $region28: #{image_merging.1} parent=5 // pred_fallthru
        _
      %p1021 = scmp.le.s32.totalorder 2, %s11
      // Predicated region
      $region33: #{image_merging.1} parent=5 // pred_check
        %p1022 = pneg %p1021
      $region34: #{image_merging.1} parent=5 // pred_check_branch
        %1024 = sbr.rel (%p1022) target = $region36
      $region35: #{image_merging.1} parent=5 // pred_region
        %s1025 = ssub.s32 %s11, 2
        // Predicated region
        $region37: #{image_merging.1} parent=35 // pred_check
          %p1026 = pneg %p87
        $region38: #{image_merging.1} parent=35 // pred_check_branch
          %1028 = sbr.rel (%p1026) target = $region40
        $region39: #{image_merging.1} parent=35 // pred_region
          %s1029 = sand.u32 %s72, 1
          %s1030 = scalar_lea.sflag [#allocation3], %s1029
          %s1031 = sand.u32 %s72, 1
          %s1032 = smul.addr %s1031, 128
          %s1033 = scalar_lea.vmem [#allocation2], %s1032
          %1034 = dma.done %s1030, 2048
        $region40: #{image_merging.1} parent=35 // pred_fallthru
          _
      $region36: #{image_merging.1} parent=5 // pred_fallthru
        _
    $region6: #{image_merging.1} parent=1 // loop_footer
      %s15 = sadd.s32 1, %s11
    $region7: #{image_merging.1} parent=1 // loop_footer_branch
      %10 = sbr.rel target = $region3
    $region8: #{image_merging.1} parent=1 // loop_exit
      _
    %1035 = vsyncpa [#allocation3], 1
    %s1036 = scalar_lea.sflag [#allocation3], 1
    %1037 = vsyncpa %s1036, 1

</llo_original>
